<compile_context>
chip_gen: v5e
topology: v5e:2x2
jax: 0.10.0
libtpu: 0.0.40
codegen_flags: <defaults>
</compile_context>

<pallas_src>
import functools

import jax
import jax.numpy as jnp
from jax.experimental import pallas as pl
from jax.experimental.pallas import tpu as pltpu


# ----------------------------- in-kernel helpers -----------------------------

def _round_up(n, m):
    return ((n + m - 1) // m) * m


def _gelu(x):
    # tanh-approx GELU (tanh goes to the EUP slot); == nn.GELU(approximate='tanh').
    # TODO(synk): if the frozen base model uses erf-GELU there is a small systematic delta.
    c = jnp.float32(0.7978845608028654)  # sqrt(2/pi)
    return 0.5 * x * (1.0 + jnp.tanh(c * (x + 0.044715 * x * x * x)))


def _dot(a, b, dt):
    # MXU matmul with f32 accumulation; weights are already stored in dt, so only the
    # activation cast happens here.  dt=bf16 is MXU-native on v5e/v6e/v7x.
    return jnp.dot(a.astype(dt), b.astype(dt), preferred_element_type=jnp.float32)


def _moe_adapter(x, dw_gate, down_b, gate_b, up_w, up_b, *, E, R, top_k, dt):
    """Residual MoE adapter, experts stacked along the lane axis.

    x       : (M, D) f32
    dw_gate : (D, E*R) if E==1 else (D, E*R + E)   -- down_w columns then gate_w columns
    down_b  : (1, E*R)     gate_b: (1, E) or None
    up_w    : (E*R, D)     up_b  : (E, D)  (row 0 only used when E==1)
    out = x + sum_e gate[:, e] * (gelu(x @ down_e + db_e) @ up_e + ub_e)
    """
    ER = E * R
    hg = _dot(x, dw_gate, dt)                                  # one MXU stream: down (+gate)
    h = _gelu(hg[:, :ER] + down_b)                             # (M, E*R)

    if E == 1:
        # Degenerate routing (single expert, top-1): gate == 1.0; no gate matmul/logits.
        return x + _dot(h, up_w, dt) + up_b                    # up_b is (1, D)

    logits = hg[:, ER:ER + E] + gate_b                         # (M, E)
    if top_k == 1:
        m = jnp.max(logits, axis=-1, keepdims=True)
        mask = (logits >= m).astype(jnp.float32)               # ties averaged (torch.argmax picks first)
        gates = mask / jnp.sum(mask, axis=-1, keepdims=True)
    else:
        # TODO(synk): true sparse top-k routing (1 < k < E); dense softmax mixture used instead.
        gates = jax.nn.softmax(logits, axis=-1)

    # Replicate each gate across its expert's R lanes via a tiny selector matmul
    # (avoids lane-axis repeat/reshape in the kernel).
    re = jax.lax.broadcasted_iota(jnp.int32, (E, ER), 0)
    rc = jax.lax.broadcasted_iota(jnp.int32, (E, ER), 1)
    sel = jnp.where((rc >= re * R) & (rc < (re + 1) * R), jnp.float32(1.0), jnp.float32(0.0))
    gate_rep = jnp.dot(gates, sel, preferred_element_type=jnp.float32)     # (M, E*R)

    return (x + _dot(h * gate_rep, up_w, dt)
            + jnp.dot(gates, up_b, preferred_element_type=jnp.float32))


# ------------------------------- fused kernel ---------------------------------

def _fused_forward_kernel(xt_ref, xi_ref, iw_ref, tslab_ref, islab_ref, up_ref, b_ref, o_ref,
                          *, B, S, Dt, Di, E, R, top_k, n_pad, dt):
    ER = E * R
    g = E if E > 1 else 0          # gate columns present only when E > 1

    tslab = tslab_ref[...]         # (Dt, Dt + E*R [+ E] + n_pad)   matmul_dtype
    islab = islab_ref[...]         # (Di, E*R [+ E] + n_pad)        matmul_dtype
    up = up_ref[...]               # (E*R, Dt + Di)                 matmul_dtype

    # bias slab (f32); static row/col slices
    text_b = b_ref[0:1, :Dt]
    img_b = b_ref[1:2, :Di]
    t_db = b_ref[2:3, :ER]
    i_db = b_ref[3:4, :ER]
    fuse_b = b_ref[4:5, :n_pad]
    t_gb = b_ref[5:6, :E] if E > 1 else None
    i_gb = b_ref[6:7, :E] if E > 1 else None
    t_ub = b_ref[8:8 + E, :Dt]
    i_ub = b_ref[8 + E:8 + 2 * E, :Di]

    # ---- text encoder: Linear+GELU -> MoE adapter -> mean-pool over S ----
    xt = xt_ref[...]                                                       # (B*S, Dt) f32
    ht = _gelu(_dot(xt, tslab[:, :Dt], dt) + text_b)
    ht = _moe_adapter(ht, tslab[:, Dt:Dt + ER + g], t_db, t_gb, up[:, :Dt], t_ub,
                      E=E, R=R, top_k=top_k, dt=dt)
    # Mean-pool over S as a (B, B*S) @ (B*S, Dt) matmul (no in-kernel reshape, no HBM trip).
    rr = jax.lax.broadcasted_iota(jnp.int32, (B, B * S), 0)
    cc = jax.lax.broadcasted_iota(jnp.int32, (B, B * S), 1)
    pool = jnp.where((cc >= rr * S) & (cc < (rr + 1) * S),
                     jnp.float32(1.0 / S), jnp.float32(0.0))
    text_feat = jnp.dot(pool, ht, preferred_element_type=jnp.float32)      # (B, Dt)

    # ---- image encoder: Linear+GELU -> MoE adapter ----
    xi = xi_ref[...]                                                       # (B, C*H*W) f32
    hi = _gelu(_dot(xi, iw_ref[...], dt) + img_b)
    img_feat = _moe_adapter(hi, islab[:, :ER + g], i_db, i_gb, up[:, Dt:Dt + Di], i_ub,
                            E=E, R=R, top_k=top_k, dt=dt)                  # (B, Di)

    # ---- fusion linear on concat([text_feat, img_feat]) as a split matmul ----
    fwt = tslab[:, Dt + ER + g:Dt + ER + g + n_pad]
    fwi = islab[:, ER + g:ER + g + n_pad]
    out = _dot(text_feat, fwt, dt) + _dot(img_feat, fwi, dt) + fuse_b
    o_ref[...] = out.astype(o_ref.dtype)                                   # lane-dense (B, 128k) store


# ---------------------------- model (params + glue) ----------------------------

class MoeAdapterWrapperPallas:
    """JAX/Pallas equivalent of MoeAdapterWrapper(base_model, num_experts=1, top_k=1)."""

    def __init__(self, text_hidden_size=32, image_hidden_size=32, fusion_output_dim=32,
                 image_chw=(4, 16, 16), adapter_rank=8, num_experts=1, top_k=1,
                 matmul_dtype=jnp.bfloat16, seed=0):
        Dt, Di = text_hidden_size, image_hidden_size
        E, R = num_experts, adapter_rank
        ER = E * R
        C, H, W = image_chw
        img_in = C * H * W

        self.text_hidden_size, self.image_hidden_size = Dt, Di
        self.fusion_output_dim = fusion_output_dim
        self.num_experts, self.top_k, self.adapter_rank = E, top_k, R
        self.matmul_dtype = matmul_dtype          # bf16 default; jnp.float32 for exact parity
        self.n_pad = _round_up(max(fusion_output_dim, 1), 128)   # lane-dense output store
        n_pad = self.n_pad

        key = jax.random.PRNGKey(seed)
        ks = list(jax.random.split(key, 12))

        def init(k, shape, scale=0.02):
            return scale * jax.random.normal(k, shape, jnp.float32)

        # frozen base-model weights
        text_w = init(ks[0], (Dt, Dt))
        text_b = init(ks[1], (Dt,))
        img_w = init(ks[2], (img_in, Di))
        img_b = init(ks[3], (Di,))
        fuse_w = init(ks[4], (Dt + Di, fusion_output_dim))
        fuse_b = init(ks[5], (fusion_output_dim,))

        # injected (trainable) MoE adapters, experts stacked along the lane axis
        t_gate_w = init(ks[6], (Dt, E))
        t_down_w = init(ks[7], (Dt, ER))
        t_up_w = init(ks[8], (ER, Dt))
        i_gate_w = init(ks[9], (Di, E))
        i_down_w = init(ks[10], (Di, ER))
        i_up_w = init(ks[11], (ER, Di))
        t_down_b = jnp.zeros((ER,), jnp.float32)
        i_down_b = jnp.zeros((ER,), jnp.float32)
        t_up_b = jnp.zeros((E, Dt), jnp.float32)
        i_up_b = jnp.zeros((E, Di), jnp.float32)
        t_gate_b = jnp.zeros((E,), jnp.float32)
        i_gate_b = jnp.zeros((E,), jnp.float32)

        # fusion weight: lane-pad output dim so the single kernel store is unmasked.
        fuse_w_pad = jnp.pad(fuse_w, ((0, 0), (0, n_pad - fusion_output_dim)))
        fuse_w_text, fuse_w_img = fuse_w_pad[:Dt], fuse_w_pad[Dt:]

        # Pack weights sharing a contraction dim into per-path slabs (stored in matmul_dtype).
        # E==1: gate columns dropped at trace time (never DMA'd).
        wdt = matmul_dtype
        t_cols = [text_w, t_down_w] + ([t_gate_w] if E > 1 else []) + [fuse_w_text]
        i_cols = [i_down_w] + ([i_gate_w] if E > 1 else []) + [fuse_w_img]
        self.t_slab = jnp.concatenate(t_cols, axis=1).astype(wdt)    # (Dt, Dt+ER[+E]+n_pad)
        self.i_slab = jnp.concatenate(i_cols, axis=1).astype(wdt)    # (Di, ER[+E]+n_pad)
        self.up_slab = jnp.concatenate([t_up_w, i_up_w], axis=1).astype(wdt)  # (ER, Dt+Di)
        self.img_w = img_w.astype(wdt)                                # dominant DMA, pre-cast

        # All tiny biases in one f32 slab (single DMA descriptor).
        Wb = max(Dt, Di, ER, E, n_pad)
        rows = 8 + 2 * E
        bias = jnp.zeros((rows, Wb), jnp.float32)
        bias = bias.at[0, :Dt].set(text_b)
        bias = bias.at[1, :Di].set(img_b)
        bias = bias.at[2, :ER].set(t_down_b)
        bias = bias.at[3, :ER].set(i_down_b)
        bias = bias.at[4, :fusion_output_dim].set(fuse_b)
        if E > 1:
            bias = bias.at[5, :E].set(t_gate_b)
            bias = bias.at[6, :E].set(i_gate_b)
        bias = bias.at[8:8 + E, :Dt].set(t_up_b)
        bias = bias.at[8 + E:8 + 2 * E, :Di].set(i_up_b)
        self.bias_slab = bias

    # TODO(synk): start_new_task()/add_expert() is host-side parameter growth (concat new
    # expert lanes/rows onto the gate/down/up slabs); not part of the kernel forward.

    def __call__(self, text, image):
        # text: (B, S, Dt) float32 token features; image: (B, C, H, W) float32 (NCHW).
        # TODO(synk): verify the real base encoder flattens NCHW row-major like reshape(B,-1).
        B, S, Dt = text.shape
        assert Dt == self.text_hidden_size
        xt = text.reshape(B * S, Dt).astype(jnp.float32)
        xi = image.reshape(B, -1).astype(jnp.float32)

        Di, E, R, n_pad = self.image_hidden_size, self.num_experts, self.adapter_rank, self.n_pad
        ER, g = E * R, (E if E > 1 else 0)
        img_in = xi.shape[1]

        kernel = functools.partial(
            _fused_forward_kernel, B=B, S=S, Dt=Dt, Di=Di, E=E, R=R,
            top_k=self.top_k, n_pad=n_pad, dt=self.matmul_dtype)

        operands = (xt, xi, self.img_w, self.t_slab, self.i_slab, self.up_slab, self.bias_slab)

        # Advisory cost estimate for XLA scheduling around the custom call.
        bytes_accessed = sum(int(a.size) * a.dtype.itemsize for a in operands) + B * n_pad * 4
        flops = 2 * (B * S * Dt * (Dt + ER + g) + B * S * ER * Dt + B * (B * S) * Dt
                     + B * img_in * Di + B * Di * (ER + g) + B * ER * Di
                     + B * (Dt + Di) * n_pad)
        transcendentals = B * S * (Dt + ER) + B * (Di + ER)

        # Single launch, no grid: every operand is a whole-array VMEM block (total ~100 KiB),
        # so weights are DMA'd exactly once and nothing leaves VMEM until the final store.
        out = pl.pallas_call(
            kernel,
            out_shape=jax.ShapeDtypeStruct((B, n_pad), jnp.float32),
            in_specs=[pl.BlockSpec(memory_space=pltpu.MemorySpace.VMEM)] * len(operands),
            out_specs=pl.BlockSpec(memory_space=pltpu.MemorySpace.VMEM),
            cost_estimate=pl.CostEstimate(flops=flops, transcendentals=transcendentals,
                                          bytes_accessed=bytes_accessed),
        )(*operands)

        return out[:, :self.fusion_output_dim]


# ------------------------------------ main ------------------------------------

if __name__ == "__main__":
    key = jax.random.PRNGKey(0)
    k_text, k_img = jax.random.split(key)

    B, S, Dt = 2, 8, 32
    C, H, W = 4, 16, 16

    text = jax.random.normal(k_text, (B, S, Dt), jnp.float32)
    image = jax.random.normal(k_img, (B, C, H, W), jnp.float32)

    model = MoeAdapterWrapperPallas(
        text_hidden_size=Dt, image_hidden_size=32, fusion_output_dim=32,
        image_chw=(C, H, W), adapter_rank=8, num_experts=1, top_k=1,
        matmul_dtype=jnp.bfloat16,   # set jnp.float32 for exact-parity testing
        seed=0,
    )

    out = model(text, image)
    jax.block_until_ready(out)
    assert out.shape == (B, model.fusion_output_dim) and out.dtype == jnp.float32
    print("KERNEL_OK")
</pallas_src>

<mosaic_0001>
module attributes {stable_mosaic.version = 11 : i64} {
  func.func @_fused_forward_kernel(%arg0: memref<16x32xf32, #tpu.memory_space<vmem>>, %arg1: memref<2x1024xf32, #tpu.memory_space<vmem>>, %arg2: memref<1024x32xbf16, #tpu.memory_space<vmem>>, %arg3: memref<32x168xbf16, #tpu.memory_space<vmem>>, %arg4: memref<32x136xbf16, #tpu.memory_space<vmem>>, %arg5: memref<8x64xbf16, #tpu.memory_space<vmem>>, %arg6: memref<10x128xf32, #tpu.memory_space<vmem>>, %arg7: memref<2x128xf32, #tpu.memory_space<vmem>>) attributes {dimension_semantics = [], scalar_prefetch = 0 : i64, scratch_operands = 0 : i64, tpu.core_type = #tpu.core_type<tc>} {
    %c0 = arith.constant 0 : index
    %c0_0 = arith.constant 0 : index
    %0 = vector.load %arg3[%c0, %c0_0] : memref<32x168xbf16, #tpu.memory_space<vmem>>, vector<32x168xbf16>
    %c0_1 = arith.constant 0 : index
    %c0_2 = arith.constant 0 : index
    %1 = vector.load %arg4[%c0_1, %c0_2] : memref<32x136xbf16, #tpu.memory_space<vmem>>, vector<32x136xbf16>
    %c0_3 = arith.constant 0 : index
    %c0_4 = arith.constant 0 : index
    %2 = vector.load %arg5[%c0_3, %c0_4] : memref<8x64xbf16, #tpu.memory_space<vmem>>, vector<8x64xbf16>
    %c0_5 = arith.constant 0 : index
    %c0_6 = arith.constant 0 : index
    %3 = vector.load %arg6[%c0_5, %c0_6] : memref<10x128xf32, #tpu.memory_space<vmem>>, vector<1x32xf32>
    %c1 = arith.constant 1 : index
    %c0_7 = arith.constant 0 : index
    %4 = vector.load %arg6[%c1, %c0_7] : memref<10x128xf32, #tpu.memory_space<vmem>>, vector<1x32xf32>
    %c2 = arith.constant 2 : index
    %c0_8 = arith.constant 0 : index
    %5 = vector.load %arg6[%c2, %c0_8] : memref<10x128xf32, #tpu.memory_space<vmem>>, vector<1x8xf32>
    %c3 = arith.constant 3 : index
    %c0_9 = arith.constant 0 : index
    %6 = vector.load %arg6[%c3, %c0_9] : memref<10x128xf32, #tpu.memory_space<vmem>>, vector<1x8xf32>
    %c4 = arith.constant 4 : index
    %c0_10 = arith.constant 0 : index
    %7 = vector.load %arg6[%c4, %c0_10] : memref<10x128xf32, #tpu.memory_space<vmem>>, vector<1x128xf32>
    %c8 = arith.constant 8 : index
    %c0_11 = arith.constant 0 : index
    %8 = vector.load %arg6[%c8, %c0_11] : memref<10x128xf32, #tpu.memory_space<vmem>>, vector<1x32xf32>
    %c9 = arith.constant 9 : index
    %c0_12 = arith.constant 0 : index
    %9 = vector.load %arg6[%c9, %c0_12] : memref<10x128xf32, #tpu.memory_space<vmem>>, vector<1x32xf32>
    %c0_13 = arith.constant 0 : index
    %c0_14 = arith.constant 0 : index
    %10 = vector.load %arg0[%c0_13, %c0_14] : memref<16x32xf32, #tpu.memory_space<vmem>>, vector<16x32xf32>
    %11 = vector.extract_strided_slice %0 {offsets = [0, 0], sizes = [32, 32], strides = [1, 1]} : vector<32x168xbf16> to vector<32x32xbf16>
    %12 = arith.truncf %10 : vector<16x32xf32> to vector<16x32xbf16>
    %cst = arith.constant dense<0.000000e+00> : vector<16x32xf32>
    %13 = tpu.matmul %12, %11, %cst {dimension_numbers = #tpu.dot_dimension_numbers<[1], [0], [0], [1], [0, 0, 1, 1], [], []>} : vector<16x32xbf16>, vector<32x32xbf16>, vector<16x32xf32> -> vector<16x32xf32>
    %14 = vector.broadcast %3 : vector<1x32xf32> to vector<16x32xf32>
    %15 = arith.addf %13, %14 : vector<16x32xf32>
    %cst_15 = arith.constant 5.000000e-01 : f32
    %16 = vector.broadcast %cst_15 : f32 to vector<16x32xf32>
    %17 = arith.mulf %16, %15 : vector<16x32xf32>
    %cst_16 = arith.constant 4.471500e-02 : f32
    %18 = vector.broadcast %cst_16 : f32 to vector<16x32xf32>
    %19 = arith.mulf %18, %15 : vector<16x32xf32>
    %20 = arith.mulf %19, %15 : vector<16x32xf32>
    %21 = arith.mulf %20, %15 : vector<16x32xf32>
    %22 = arith.addf %15, %21 : vector<16x32xf32>
    %cst_17 = arith.constant 0.797884583 : f32
    %23 = vector.broadcast %cst_17 : f32 to vector<16x32xf32>
    %24 = arith.mulf %23, %22 : vector<16x32xf32>
    %25 = math.tanh %24 : vector<16x32xf32>
    %cst_18 = arith.constant 1.000000e+00 : f32
    %26 = vector.broadcast %cst_18 : f32 to vector<16x32xf32>
    %27 = arith.addf %26, %25 : vector<16x32xf32>
    %28 = arith.mulf %17, %27 : vector<16x32xf32>
    %29 = vector.extract_strided_slice %0 {offsets = [0, 32], sizes = [32, 8], strides = [1, 1]} : vector<32x168xbf16> to vector<32x8xbf16>
    %30 = vector.extract_strided_slice %2 {offsets = [0, 0], sizes = [8, 32], strides = [1, 1]} : vector<8x64xbf16> to vector<8x32xbf16>
    %31 = arith.truncf %28 : vector<16x32xf32> to vector<16x32xbf16>
    %cst_19 = arith.constant dense<0.000000e+00> : vector<16x8xf32>
    %32 = tpu.matmul %31, %29, %cst_19 {dimension_numbers = #tpu.dot_dimension_numbers<[1], [0], [0], [1], [0, 0, 1, 1], [], []>} : vector<16x32xbf16>, vector<32x8xbf16>, vector<16x8xf32> -> vector<16x8xf32>
    %33 = vector.broadcast %5 : vector<1x8xf32> to vector<16x8xf32>
    %34 = arith.addf %32, %33 : vector<16x8xf32>
    %cst_20 = arith.constant 5.000000e-01 : f32
    %35 = vector.broadcast %cst_20 : f32 to vector<16x8xf32>
    %36 = arith.mulf %35, %34 : vector<16x8xf32>
    %cst_21 = arith.constant 4.471500e-02 : f32
    %37 = vector.broadcast %cst_21 : f32 to vector<16x8xf32>
    %38 = arith.mulf %37, %34 : vector<16x8xf32>
    %39 = arith.mulf %38, %34 : vector<16x8xf32>
    %40 = arith.mulf %39, %34 : vector<16x8xf32>
    %41 = arith.addf %34, %40 : vector<16x8xf32>
    %cst_22 = arith.constant 0.797884583 : f32
    %42 = vector.broadcast %cst_22 : f32 to vector<16x8xf32>
    %43 = arith.mulf %42, %41 : vector<16x8xf32>
    %44 = math.tanh %43 : vector<16x8xf32>
    %cst_23 = arith.constant 1.000000e+00 : f32
    %45 = vector.broadcast %cst_23 : f32 to vector<16x8xf32>
    %46 = arith.addf %45, %44 : vector<16x8xf32>
    %47 = arith.mulf %36, %46 : vector<16x8xf32>
    %48 = arith.truncf %47 : vector<16x8xf32> to vector<16x8xbf16>
    %cst_24 = arith.constant dense<0.000000e+00> : vector<16x32xf32>
    %49 = tpu.matmul %48, %30, %cst_24 {dimension_numbers = #tpu.dot_dimension_numbers<[1], [0], [0], [1], [0, 0, 1, 1], [], []>} : vector<16x8xbf16>, vector<8x32xbf16>, vector<16x32xf32> -> vector<16x32xf32>
    %50 = arith.addf %28, %49 : vector<16x32xf32>
    %51 = vector.broadcast %8 : vector<1x32xf32> to vector<16x32xf32>
    %52 = arith.addf %50, %51 : vector<16x32xf32>
    %53 = tpu.iota {dimensions = array<i32: 0>} : vector<2x16xi32>
    %54 = tpu.iota {dimensions = array<i32: 1>} : vector<2x16xi32>
    %c8_i32 = arith.constant 8 : i32
    %55 = vector.broadcast %c8_i32 : i32 to vector<2x16xi32>
    %56 = arith.muli %53, %55 : vector<2x16xi32>
    %57 = arith.cmpi sge, %54, %56 : vector<2x16xi32>
    %c1_i32 = arith.constant 1 : i32
    %58 = vector.broadcast %c1_i32 : i32 to vector<2x16xi32>
    %59 = arith.addi %53, %58 : vector<2x16xi32>
    %c8_i32_25 = arith.constant 8 : i32
    %60 = vector.broadcast %c8_i32_25 : i32 to vector<2x16xi32>
    %61 = arith.muli %59, %60 : vector<2x16xi32>
    %62 = arith.cmpi slt, %54, %61 : vector<2x16xi32>
    %63 = arith.andi %57, %62 : vector<2x16xi1>
    %cst_26 = arith.constant 1.250000e-01 : f32
    %cst_27 = arith.constant 0.000000e+00 : f32
    %64 = vector.broadcast %cst_26 : f32 to vector<2x16xf32>
    %65 = vector.broadcast %cst_27 : f32 to vector<2x16xf32>
    %66 = arith.select %63, %64, %65 : vector<2x16xi1>, vector<2x16xf32>
    %cst_28 = arith.constant dense<0.000000e+00> : vector<2x32xf32>
    %67 = tpu.matmul %66, %52, %cst_28 {dimension_numbers = #tpu.dot_dimension_numbers<[1], [0], [0], [1], [0, 0, 1, 1], [], []>} : vector<2x16xf32>, vector<16x32xf32>, vector<2x32xf32> -> vector<2x32xf32>
    %c0_29 = arith.constant 0 : index
    %c0_30 = arith.constant 0 : index
    %68 = vector.load %arg1[%c0_29, %c0_30] : memref<2x1024xf32, #tpu.memory_space<vmem>>, vector<2x1024xf32>
    %c0_31 = arith.constant 0 : index
    %c0_32 = arith.constant 0 : index
    %69 = vector.load %arg2[%c0_31, %c0_32] : memref<1024x32xbf16, #tpu.memory_space<vmem>>, vector<1024x32xbf16>
    %70 = arith.truncf %68 : vector<2x1024xf32> to vector<2x1024xbf16>
    %cst_33 = arith.constant dense<0.000000e+00> : vector<2x32xf32>
    %71 = tpu.matmul %70, %69, %cst_33 {dimension_numbers = #tpu.dot_dimension_numbers<[1], [0], [0], [1], [0, 0, 1, 1], [], []>} : vector<2x1024xbf16>, vector<1024x32xbf16>, vector<2x32xf32> -> vector<2x32xf32>
    %72 = vector.broadcast %4 : vector<1x32xf32> to vector<2x32xf32>
    %73 = arith.addf %71, %72 : vector<2x32xf32>
    %cst_34 = arith.constant 5.000000e-01 : f32
    %74 = vector.broadcast %cst_34 : f32 to vector<2x32xf32>
    %75 = arith.mulf %74, %73 : vector<2x32xf32>
    %cst_35 = arith.constant 4.471500e-02 : f32
    %76 = vector.broadcast %cst_35 : f32 to vector<2x32xf32>
    %77 = arith.mulf %76, %73 : vector<2x32xf32>
    %78 = arith.mulf %77, %73 : vector<2x32xf32>
    %79 = arith.mulf %78, %73 : vector<2x32xf32>
    %80 = arith.addf %73, %79 : vector<2x32xf32>
    %cst_36 = arith.constant 0.797884583 : f32
    %81 = vector.broadcast %cst_36 : f32 to vector<2x32xf32>
    %82 = arith.mulf %81, %80 : vector<2x32xf32>
    %83 = math.tanh %82 : vector<2x32xf32>
    %cst_37 = arith.constant 1.000000e+00 : f32
    %84 = vector.broadcast %cst_37 : f32 to vector<2x32xf32>
    %85 = arith.addf %84, %83 : vector<2x32xf32>
    %86 = arith.mulf %75, %85 : vector<2x32xf32>
    %87 = vector.extract_strided_slice %1 {offsets = [0, 0], sizes = [32, 8], strides = [1, 1]} : vector<32x136xbf16> to vector<32x8xbf16>
    %88 = vector.extract_strided_slice %2 {offsets = [0, 32], sizes = [8, 32], strides = [1, 1]} : vector<8x64xbf16> to vector<8x32xbf16>
    %89 = arith.truncf %86 : vector<2x32xf32> to vector<2x32xbf16>
    %cst_38 = arith.constant dense<0.000000e+00> : vector<2x8xf32>
    %90 = tpu.matmul %89, %87, %cst_38 {dimension_numbers = #tpu.dot_dimension_numbers<[1], [0], [0], [1], [0, 0, 1, 1], [], []>} : vector<2x32xbf16>, vector<32x8xbf16>, vector<2x8xf32> -> vector<2x8xf32>
    %91 = vector.broadcast %6 : vector<1x8xf32> to vector<2x8xf32>
    %92 = arith.addf %90, %91 : vector<2x8xf32>
    %cst_39 = arith.constant 5.000000e-01 : f32
    %93 = vector.broadcast %cst_39 : f32 to vector<2x8xf32>
    %94 = arith.mulf %93, %92 : vector<2x8xf32>
    %cst_40 = arith.constant 4.471500e-02 : f32
    %95 = vector.broadcast %cst_40 : f32 to vector<2x8xf32>
    %96 = arith.mulf %95, %92 : vector<2x8xf32>
    %97 = arith.mulf %96, %92 : vector<2x8xf32>
    %98 = arith.mulf %97, %92 : vector<2x8xf32>
    %99 = arith.addf %92, %98 : vector<2x8xf32>
    %cst_41 = arith.constant 0.797884583 : f32
    %100 = vector.broadcast %cst_41 : f32 to vector<2x8xf32>
    %101 = arith.mulf %100, %99 : vector<2x8xf32>
    %102 = math.tanh %101 : vector<2x8xf32>
    %cst_42 = arith.constant 1.000000e+00 : f32
    %103 = vector.broadcast %cst_42 : f32 to vector<2x8xf32>
    %104 = arith.addf %103, %102 : vector<2x8xf32>
    %105 = arith.mulf %94, %104 : vector<2x8xf32>
    %106 = arith.truncf %105 : vector<2x8xf32> to vector<2x8xbf16>
    %cst_43 = arith.constant dense<0.000000e+00> : vector<2x32xf32>
    %107 = tpu.matmul %106, %88, %cst_43 {dimension_numbers = #tpu.dot_dimension_numbers<[1], [0], [0], [1], [0, 0, 1, 1], [], []>} : vector<2x8xbf16>, vector<8x32xbf16>, vector<2x32xf32> -> vector<2x32xf32>
    %108 = arith.addf %86, %107 : vector<2x32xf32>
    %109 = vector.broadcast %9 : vector<1x32xf32> to vector<2x32xf32>
    %110 = arith.addf %108, %109 : vector<2x32xf32>
    %111 = vector.extract_strided_slice %0 {offsets = [0, 40], sizes = [32, 128], strides = [1, 1]} : vector<32x168xbf16> to vector<32x128xbf16>
    %112 = vector.extract_strided_slice %1 {offsets = [0, 8], sizes = [32, 128], strides = [1, 1]} : vector<32x136xbf16> to vector<32x128xbf16>
    %113 = arith.truncf %67 : vector<2x32xf32> to vector<2x32xbf16>
    %cst_44 = arith.constant dense<0.000000e+00> : vector<2x128xf32>
    %114 = tpu.matmul %113, %111, %cst_44 {dimension_numbers = #tpu.dot_dimension_numbers<[1], [0], [0], [1], [0, 0, 1, 1], [], []>} : vector<2x32xbf16>, vector<32x128xbf16>, vector<2x128xf32> -> vector<2x128xf32>
    %115 = arith.truncf %110 : vector<2x32xf32> to vector<2x32xbf16>
    %cst_45 = arith.constant dense<0.000000e+00> : vector<2x128xf32>
    %116 = tpu.matmul %115, %112, %cst_45 {dimension_numbers = #tpu.dot_dimension_numbers<[1], [0], [0], [1], [0, 0, 1, 1], [], []>} : vector<2x32xbf16>, vector<32x128xbf16>, vector<2x128xf32> -> vector<2x128xf32>
    %117 = arith.addf %114, %116 : vector<2x128xf32>
    %118 = vector.broadcast %7 : vector<1x128xf32> to vector<2x128xf32>
    %119 = arith.addf %117, %118 : vector<2x128xf32>
    %c0_46 = arith.constant 0 : index
    %c0_47 = arith.constant 0 : index
    %120 = vector.load %arg7[%c0_46, %c0_47] : memref<2x128xf32, #tpu.memory_space<vmem>>, vector<2x128xf32>
    tpu.vector_store %arg7[%c0_46, %c0_47], %119 {strides = array<i32>} : memref<2x128xf32, #tpu.memory_space<vmem>>, vector<2x128xf32>,
    return
  }
}

</mosaic_0001>

<llo_original>
// kernel: tpu_custom_call.1
$region0: #{tpu_custom_call.1}
  #allocation0 [shape = 'u32[]', space=smem, size = 0x4, offset = 0x4, fixed_abs, tag = 'smem constant byte address 0x4 - core index']
  #allocation1 [shape = 'u32[72,128]{1,0:T(1,128)}', space=vmem, size = 0x9000, scoped, tag = 'internal scratch']
  %s0 = inlined_call_operand.vmem [shape: f32[16,32], index: 0, kind: input, shape index: {}]
  %s1 = inlined_call_operand.vmem [shape: f32[2,1024], index: 1, kind: input, shape index: {}]
  %s2 = inlined_call_operand.vmem [shape: bf16[1024,32], index: 2, kind: input, shape index: {}]
  %s3 = inlined_call_operand.vmem [shape: bf16[32,168], index: 3, kind: input, shape index: {}]
  %s4 = inlined_call_operand.vmem [shape: bf16[32,136], index: 4, kind: input, shape index: {}]
  %s5 = inlined_call_operand.vmem [shape: bf16[8,64], index: 5, kind: input, shape index: {}]
  %s6 = inlined_call_operand.vmem [shape: f32[10,128], index: 6, kind: input, shape index: {}]
  %s7 = inlined_call_operand.hbm [shape: f32[2,128], index: 7, kind: output, shape index: {}]
  %s8 = sld [smem:[#allocation0]]
  $region38: #{tpu_custom_call.1} parent=0
    _
  %s10 = ssub.s32 1, %s8
  %s11 = scalar_select 0, %s10, %s8
  $region1: #{tpu_custom_call.1} parent=0
    #allocation2 [shape = 'u8[1024]{0}', space=vmem, size = 0x400, scoped, tag = 'output window, operand 0, single buffered']
    #allocation3 [shape = 's32[1]{0}', space=sflag, size = 0x4, scoped, tag = 'scoped memory for tpu_custom_call.1']
    %12 = vsyncpa [#allocation3], 0
    // Predicated region
    $region2: #{tpu_custom_call.1} parent=1 // pred_check
      _
    $region3: #{tpu_custom_call.1} parent=1 // pred_check_branch
      %14 = sbr.rel (0) target = $region5
    $region4: #{tpu_custom_call.1} parent=1 // pred_region
      _
    $region5: #{tpu_custom_call.1} parent=1 // pred_fallthru
      _
    // Predicated region
    $region6: #{tpu_custom_call.1} parent=1 // pred_check
      _
    $region7: #{tpu_custom_call.1} parent=1 // pred_check_branch
      %16 = sbr.rel (0) target = $region9
    $region8: #{tpu_custom_call.1} parent=1 // pred_region
      _
    $region9: #{tpu_custom_call.1} parent=1 // pred_fallthru
      _
    // Predicated region
    $region10: #{tpu_custom_call.1} parent=1 // pred_check
      _
    $region11: #{tpu_custom_call.1} parent=1 // pred_check_branch
      %18 = sbr.rel (0) target = $region13
    $region12: #{tpu_custom_call.1} parent=1 // pred_region
      _
    $region13: #{tpu_custom_call.1} parent=1 // pred_fallthru
      _
    // Predicated region
    $region14: #{tpu_custom_call.1} parent=1 // pred_check
      _
    $region15: #{tpu_custom_call.1} parent=1 // pred_check_branch
      %20 = sbr.rel (0) target = $region17
    $region16: #{tpu_custom_call.1} parent=1 // pred_region
      _
    $region17: #{tpu_custom_call.1} parent=1 // pred_fallthru
      _
    // Predicated region
    $region18: #{tpu_custom_call.1} parent=1 // pred_check
      _
    $region19: #{tpu_custom_call.1} parent=1 // pred_check_branch
      %22 = sbr.rel (0) target = $region21
    $region20: #{tpu_custom_call.1} parent=1 // pred_region
      _
    $region21: #{tpu_custom_call.1} parent=1 // pred_fallthru
      _
    // Predicated region
    $region22: #{tpu_custom_call.1} parent=1 // pred_check
      _
    $region23: #{tpu_custom_call.1} parent=1 // pred_check_branch
      %24 = sbr.rel (0) target = $region25
    $region24: #{tpu_custom_call.1} parent=1 // pred_region
      _
    $region25: #{tpu_custom_call.1} parent=1 // pred_fallthru
      _
    // Predicated region
    $region26: #{tpu_custom_call.1} parent=1 // pred_check
      _
    $region27: #{tpu_custom_call.1} parent=1 // pred_check_branch
      %26 = sbr.rel (0) target = $region29
    $region28: #{tpu_custom_call.1} parent=1 // pred_region
      _
    $region29: #{tpu_custom_call.1} parent=1 // pred_fallthru
      _
    %v28 = vld [vmem:[%s3] sm:$0xff]
    %v29 = vld [vmem:[%s3 + $0x8] sm:$0xff]
    %v30 = vld [vmem:[%s3 + $0x10] sm:$0xff]
    %v31 = vld [vmem:[%s3 + $0x18] sm:$0xff]
    %v32 = vld [vmem:[%s4] sm:$0xff]
    %v33 = vld [vmem:[%s4 + $0x8] sm:$0xff]
    %v34 = vld [vmem:[%s4 + $0x10] sm:$0xff]
    %v35 = vld [vmem:[%s4 + $0x18] sm:$0xff]
    %v36 = vld [vmem:[%s5] sm:$0xf]
    %v37 = vld [vmem:[%s6] sm:$0x1]
    %v38 = vld [vmem:[%s6 + $0x1] sm:$0x1]
    %v39 = vld [vmem:[%s6 + $0x2] sm:$0x1]
    %v40 = vld [vmem:[%s6 + $0x3] sm:$0x1]
    %v41 = vld [vmem:[%s6 + $0x4] sm:$0x1]
    %v42 = vld [vmem:[%s6 + $0x8] sm:$0x1]
    %v43 = vld [vmem:[%s6 + $0x9] sm:$0x1]
    %v44 = vld [vmem:[%s0] sm:$0xff]
    %v45 = vld [vmem:[%s0 + $0x8] sm:$0xff]
    %v46 = vpack.c.bf16 %v45, %v44
    %v47 = vperm.slane %v37, 0
    %v52 = vunpack.c.l.b16 %v28
    %v53 = vunpack.c.l.b16 %v29
    %v54 = vunpack.c.l.b16 %v30
    %v55 = vunpack.c.l.b16 %v31
    %v56 = vpack.c.b16 %v53, %v52
    %v57 = vpack.c.b16 %v55, %v54
    %vm60 = vcmask 261120
    %v62 = vsel %vm60, %v46, 0
    %64 = vmatpush.bf16.msra.mxu0 0
    %65 = vmatpush.bf16.msra.mxu0 0
    %66 = vmatpush.bf16.msra.mxu0 0
    %67 = vmatpush.bf16.msra.mxu0 0
    %68 = vmatpush.bf16.msra.mxu0 0
    %69 = vmatpush.bf16.msra.mxu0 0
    %70 = vmatpush.bf16.msra.mxu0 %v57
    %71 = vmatpush.bf16.msra.mxu0 %v56
    %72 = vmatmul.bf16.gmra.mxu0 %v62
    %v73 = vpop.f32.mrf.mxu0
    %v74 = vadd.f32 %v47, %v73
    %v75 = vpop.f32.mrf.mxu0
    %v76 = vadd.f32 %v47, %v75
    %77 = vdwg.mxu0
    %v78 = vmul.f32 %v74, 0.5
    %v79 = vmul.f32 %v76, 0.5
    %v80 = vmul.f32 %v74, 0.044715
    %v81 = vmul.f32 %v76, 0.044715
    %v82 = vmul.f32 %v80, %v74
    %v83 = vmul.f32 %v81, %v76
    %v84 = vmul.f32 %v82, %v74
    %v85 = vmul.f32 %v83, %v76
    %v86 = vadd.f32 %v74, %v84
    %v87 = vadd.f32 %v76, %v85
    %v88 = vmul.f32 %v86, 0.7978846
    %v89 = vmul.f32 %v87, 0.7978846
    %v90 = vtanh.pop %v88
    %v91 = vtanh.pop %v89
    %v92 = vadd.f32 %v90, 1.0
    %v93 = vadd.f32 %v91, 1.0
    %v94 = vmul.f32 %v78, %v92
    %v95 = vmul.f32 %v79, %v93
    %v96 = vpack.c.bf16 %v95, %v94
    %v97 = vperm.slane %v39, 0
    %98 = vrot.lane.b32.xlu0 %v56, 96
    %v99 = vpop.permute.xlu0 %98
    %100 = vrot.lane.b32.xlu0 %v57, 96
    %v101 = vpop.permute.xlu0 %100
    %v105 = vsel %vm60, %v96, 0
    %107 = vmatpush.bf16.msra.mxu0 0
    %108 = vmatpush.bf16.msra.mxu0 0
    %109 = vmatpush.bf16.msra.mxu0 0
    %110 = vmatpush.bf16.msra.mxu0 0
    %111 = vmatpush.bf16.msra.mxu0 0
    %112 = vmatpush.bf16.msra.mxu0 0
    %113 = vmatpush.bf16.msra.mxu0 %v101
    %114 = vmatpush.bf16.msra.mxu0 %v99
    %115 = vmatmul.bf16.gmra.mxu0 %v105
    %v116 = vpop.f32.mrf.mxu0
    %v117 = vadd.f32 %v97, %v116
    %v118 = vpop.f32.mrf.mxu0
    %v119 = vadd.f32 %v97, %v118
    %120 = vdwg.mxu0
    %v121 = vmul.f32 %v117, 0.5
    %v122 = vmul.f32 %v119, 0.5
    %v123 = vmul.f32 %v117, 0.044715
    %v124 = vmul.f32 %v119, 0.044715
    %v125 = vmul.f32 %v123, %v117
    %v126 = vmul.f32 %v124, %v119
    %v127 = vmul.f32 %v125, %v117
    %v128 = vmul.f32 %v126, %v119
    %v129 = vadd.f32 %v117, %v127
    %v130 = vadd.f32 %v119, %v128
    %v131 = vmul.f32 %v129, 0.7978846
    %v132 = vmul.f32 %v130, 0.7978846
    %v133 = vtanh.pop %v131
    %v134 = vtanh.pop %v132
    %v135 = vadd.f32 %v133, 1.0
    %v136 = vadd.f32 %v134, 1.0
    %v137 = vmul.f32 %v121, %v135
    %v138 = vmul.f32 %v122, %v136
    %v139 = vpack.c.bf16 %v138, %v137
    %vm140 = vcmask 64512
    %v142 = vsel %vm140, %v139, 0
    %vm144 = vcmask 1043456
    %v146 = vsel %vm144, %v36, 0
    %148 = vmatpush.bf16.msra.mxu0 0
    %149 = vmatpush.bf16.msra.mxu0 0
    %150 = vmatpush.bf16.msra.mxu0 0
    %151 = vmatpush.bf16.msra.mxu0 0
    %152 = vmatpush.bf16.msra.mxu0 0
    %153 = vmatpush.bf16.msra.mxu0 0
    %154 = vmatpush.bf16.msra.mxu0 0
    %155 = vmatpush.bf16.msra.mxu0 %v146
    %156 = vmatmul.bf16.gmra.mxu0 %v142
    %v157 = vpop.f32.mrf.mxu0
    %v158 = vadd.f32 0.0, %v157
    %v159 = vpop.f32.mrf.mxu0
    %v160 = vadd.f32 0.0, %v159
    %161 = vdwg.mxu0
    %v162 = vadd.f32 %v94, %v158
    %v163 = vadd.f32 %v95, %v160
    %v164 = vperm.slane %v42, 0
    %v165 = vadd.f32 %v162, %v164
    %v166 = vadd.f32 %v163, %v164
    %v167 = vlaneseq
    %v168 = vshrl.u32 %v167, 7
    %v169 = vlaneseq
    %v170 = vand.u32 %v169, 127
    %v171 = vmul.u32 %v168, 8
    %vm172 = vcmp.ge.s32.totalorder %v170, %v171
    %v173 = vadd.s32 %v168, 1
    %v174 = vmul.u32 %v173, 8
    %vm175 = vcmp.lt.s32.totalorder %v170, %v174
    %vm176 = vmand %vm172, %vm175
    %v177 = vsel %vm176, 0.125, 0.0
    %vm178 = vcmask 130048
    %v180 = vsel %vm178, %v177, 0
    %182 = vmatpush.msra.mxu0 0.0
    %183 = vmatpush.msra.mxu0 0.0
    %184 = vmatpush.msra.mxu0 0.0
    %185 = vmatpush.msra.mxu0 0.0
    %186 = vmatpush.msra.mxu0 0.0
    %187 = vmatpush.msra.mxu0 0.0
    %188 = vmatpush.msra.mxu0 0.0
    %189 = vmatpush.msra.mxu0 0.0
    %190 = vmatpush.msra.mxu0 0.0
    %191 = vmatpush.msra.mxu0 0.0
    %192 = vmatpush.msra.mxu0 0.0
    %193 = vmatpush.msra.mxu0 0.0
    %194 = vmatpush.msra.mxu0 0.0
    %195 = vmatpush.msra.mxu0 0.0
    %196 = vmatpush.msra.mxu0 %v166
    %197 = vmatpush.msra.mxu0 %v165
    %198 = vmatmul.f32.gmra.mxu0 %v180
    %v199 = vpop.f32.mrf.mxu0
    %v200 = vadd.f32 0.0, %v199
    %201 = vdwg.mxu0
    %v202 = vld [vmem:[%s1] sm:$0xff]
    %v203 = vld [vmem:[%s1 + $0x8] sm:$0xff]
    %v204 = vld [vmem:[%s2] sm:$0xf]
    %v205 = vld [vmem:[%s2 + $0x4] sm:$0xf]
    %v206 = vld [vmem:[%s2 + $0x8] sm:$0xf]
    %v207 = vld [vmem:[%s2 + $0xc] sm:$0xf]
    %v208 = vld [vmem:[%s2 + $0x10] sm:$0xf]
    %v209 = vld [vmem:[%s2 + $0x14] sm:$0xf]
    %v210 = vld [vmem:[%s2 + $0x18] sm:$0xf]
    %v211 = vld [vmem:[%s2 + $0x1c] sm:$0xf]
    %v212 = vld [vmem:[%s2 + $0x20] sm:$0xf]
    %v213 = vld [vmem:[%s2 + $0x24] sm:$0xf]
    %v214 = vld [vmem:[%s2 + $0x28] sm:$0xf]
    %v215 = vld [vmem:[%s2 + $0x2c] sm:$0xf]
    %v216 = vld [vmem:[%s2 + $0x30] sm:$0xf]
    %v217 = vld [vmem:[%s2 + $0x34] sm:$0xf]
    %v218 = vld [vmem:[%s2 + $0x38] sm:$0xf]
    %v219 = vld [vmem:[%s2 + $0x3c] sm:$0xf]
    %v220 = vld [vmem:[%s2 + $0x40] sm:$0xf]
    %v221 = vld [vmem:[%s2 + $0x44] sm:$0xf]
    %v222 = vld [vmem:[%s2 + $0x48] sm:$0xf]
    %v223 = vld [vmem:[%s2 + $0x4c] sm:$0xf]
    %v224 = vld [vmem:[%s2 + $0x50] sm:$0xf]
    %v225 = vld [vmem:[%s2 + $0x54] sm:$0xf]
    %v226 = vld [vmem:[%s2 + $0x58] sm:$0xf]
    %v227 = vld [vmem:[%s2 + $0x5c] sm:$0xf]
    %v228 = vld [vmem:[%s2 + $0x60] sm:$0xf]
    %v229 = vld [vmem:[%s2 + $0x64] sm:$0xf]
    %v230 = vld [vmem:[%s2 + $0x68] sm:$0xf]
    %v231 = vld [vmem:[%s2 + $0x6c] sm:$0xf]
    %v232 = vld [vmem:[%s2 + $0x70] sm:$0xf]
    %v233 = vld [vmem:[%s2 + $0x74] sm:$0xf]
    %v234 = vld [vmem:[%s2 + $0x78] sm:$0xf]
    %v235 = vld [vmem:[%s2 + $0x7c] sm:$0xf]
    %v236 = vld [vmem:[%s2 + $0x80] sm:$0xf]
    %v237 = vld [vmem:[%s2 + $0x84] sm:$0xf]
    %v238 = vld [vmem:[%s2 + $0x88] sm:$0xf]
    %v239 = vld [vmem:[%s2 + $0x8c] sm:$0xf]
    %v240 = vld [vmem:[%s2 + $0x90] sm:$0xf]
    %v241 = vld [vmem:[%s2 + $0x94] sm:$0xf]
    %v242 = vld [vmem:[%s2 + $0x98] sm:$0xf]
    %v243 = vld [vmem:[%s2 + $0x9c] sm:$0xf]
    %v244 = vld [vmem:[%s2 + $0xa0] sm:$0xf]
    %v245 = vld [vmem:[%s2 + $0xa4] sm:$0xf]
    %v246 = vld [vmem:[%s2 + $0xa8] sm:$0xf]
    %v247 = vld [vmem:[%s2 + $0xac] sm:$0xf]
    %v248 = vld [vmem:[%s2 + $0xb0] sm:$0xf]
    %v249 = vld [vmem:[%s2 + $0xb4] sm:$0xf]
    %v250 = vld [vmem:[%s2 + $0xb8] sm:$0xf]
    %v251 = vld [vmem:[%s2 + $0xbc] sm:$0xf]
    %v252 = vld [vmem:[%s2 + $0xc0] sm:$0xf]
    %v253 = vld [vmem:[%s2 + $0xc4] sm:$0xf]
    %v254 = vld [vmem:[%s2 + $0xc8] sm:$0xf]
    %v255 = vld [vmem:[%s2 + $0xcc] sm:$0xf]
    %v256 = vld [vmem:[%s2 + $0xd0] sm:$0xf]
    %v257 = vld [vmem:[%s2 + $0xd4] sm:$0xf]
    %v258 = vld [vmem:[%s2 + $0xd8] sm:$0xf]
    %v259 = vld [vmem:[%s2 + $0xdc] sm:$0xf]
    %v260 = vld [vmem:[%s2 + $0xe0] sm:$0xf]
    %v261 = vld [vmem:[%s2 + $0xe4] sm:$0xf]
    %v262 = vld [vmem:[%s2 + $0xe8] sm:$0xf]
    %v263 = vld [vmem:[%s2 + $0xec] sm:$0xf]
    %v264 = vld [vmem:[%s2 + $0xf0] sm:$0xf]
    %v265 = vld [vmem:[%s2 + $0xf4] sm:$0xf]
    %v266 = vld [vmem:[%s2 + $0xf8] sm:$0xf]
    %v267 = vld [vmem:[%s2 + $0xfc] sm:$0xf]
    %v268 = vld [vmem:[%s2 + $0x100] sm:$0xf]
    %v269 = vld [vmem:[%s2 + $0x104] sm:$0xf]
    %v270 = vld [vmem:[%s2 + $0x108] sm:$0xf]
    %v271 = vld [vmem:[%s2 + $0x10c] sm:$0xf]
    %v272 = vld [vmem:[%s2 + $0x110] sm:$0xf]
    %v273 = vld [vmem:[%s2 + $0x114] sm:$0xf]
    %v274 = vld [vmem:[%s2 + $0x118] sm:$0xf]
    %v275 = vld [vmem:[%s2 + $0x11c] sm:$0xf]
    %v276 = vld [vmem:[%s2 + $0x120] sm:$0xf]
    %v277 = vld [vmem:[%s2 + $0x124] sm:$0xf]
    %v278 = vld [vmem:[%s2 + $0x128] sm:$0xf]
    %v279 = vld [vmem:[%s2 + $0x12c] sm:$0xf]
    %v280 = vld [vmem:[%s2 + $0x130] sm:$0xf]
    %v281 = vld [vmem:[%s2 + $0x134] sm:$0xf]
    %v282 = vld [vmem:[%s2 + $0x138] sm:$0xf]
    %v283 = vld [vmem:[%s2 + $0x13c] sm:$0xf]
    %v284 = vld [vmem:[%s2 + $0x140] sm:$0xf]
    %v285 = vld [vmem:[%s2 + $0x144] sm:$0xf]
    %v286 = vld [vmem:[%s2 + $0x148] sm:$0xf]
    %v287 = vld [vmem:[%s2 + $0x14c] sm:$0xf]
    %v288 = vld [vmem:[%s2 + $0x150] sm:$0xf]
    %v289 = vld [vmem:[%s2 + $0x154] sm:$0xf]
    %v290 = vld [vmem:[%s2 + $0x158] sm:$0xf]
    %v291 = vld [vmem:[%s2 + $0x15c] sm:$0xf]
    %v292 = vld [vmem:[%s2 + $0x160] sm:$0xf]
    %v293 = vld [vmem:[%s2 + $0x164] sm:$0xf]
    %v294 = vld [vmem:[%s2 + $0x168] sm:$0xf]
    %v295 = vld [vmem:[%s2 + $0x16c] sm:$0xf]
    %v296 = vld [vmem:[%s2 + $0x170] sm:$0xf]
    %v297 = vld [vmem:[%s2 + $0x174] sm:$0xf]
    %v298 = vld [vmem:[%s2 + $0x178] sm:$0xf]
    %v299 = vld [vmem:[%s2 + $0x17c] sm:$0xf]
    %v300 = vld [vmem:[%s2 + $0x180] sm:$0xf]
    %v301 = vld [vmem:[%s2 + $0x184] sm:$0xf]
    %v302 = vld [vmem:[%s2 + $0x188] sm:$0xf]
    %v303 = vld [vmem:[%s2 + $0x18c] sm:$0xf]
    %v304 = vld [vmem:[%s2 + $0x190] sm:$0xf]
    %v305 = vld [vmem:[%s2 + $0x194] sm:$0xf]
    %v306 = vld [vmem:[%s2 + $0x198] sm:$0xf]
    %v307 = vld [vmem:[%s2 + $0x19c] sm:$0xf]
    %v308 = vld [vmem:[%s2 + $0x1a0] sm:$0xf]
    %v309 = vld [vmem:[%s2 + $0x1a4] sm:$0xf]
    %v310 = vld [vmem:[%s2 + $0x1a8] sm:$0xf]
    %v311 = vld [vmem:[%s2 + $0x1ac] sm:$0xf]
    %v312 = vld [vmem:[%s2 + $0x1b0] sm:$0xf]
    %v313 = vld [vmem:[%s2 + $0x1b4] sm:$0xf]
    %v314 = vld [vmem:[%s2 + $0x1b8] sm:$0xf]
    %v315 = vld [vmem:[%s2 + $0x1bc] sm:$0xf]
    %v316 = vld [vmem:[%s2 + $0x1c0] sm:$0xf]
    %v317 = vld [vmem:[%s2 + $0x1c4] sm:$0xf]
    %v318 = vld [vmem:[%s2 + $0x1c8] sm:$0xf]
    %v319 = vld [vmem:[%s2 + $0x1cc] sm:$0xf]
    %v320 = vld [vmem:[%s2 + $0x1d0] sm:$0xf]
    %v321 = vld [vmem:[%s2 + $0x1d4] sm:$0xf]
    %v322 = vld [vmem:[%s2 + $0x1d8] sm:$0xf]
    %v323 = vld [vmem:[%s2 + $0x1dc] sm:$0xf]
    %v324 = vld [vmem:[%s2 + $0x1e0] sm:$0xf]
    %v325 = vld [vmem:[%s2 + $0x1e4] sm:$0xf]
    %v326 = vld [vmem:[%s2 + $0x1e8] sm:$0xf]
    %v327 = vld [vmem:[%s2 + $0x1ec] sm:$0xf]
    %v328 = vld [vmem:[%s2 + $0x1f0] sm:$0xf]
    %v329 = vld [vmem:[%s2 + $0x1f4] sm:$0xf]
    %v330 = vld [vmem:[%s2 + $0x1f8] sm:$0xf]
    %v331 = vld [vmem:[%s2 + $0x1fc] sm:$0xf]
    %334 = vst [vmem:[#allocation1] ss:$4 sm:$0xff] %v202
    %s335 = scalar_lea.vmem [#allocation1], 32
    %336 = vst [vmem:[%s335] ss:$4 sm:$0xff] %v203
    %v337 = vld.sshfl [vmem:[#allocation1] sm:$0xff pattern:$0x73625140]
    %v338 = vld.sshfl [vmem:[#allocation1 + $0x8] sm:$0xff pattern:$0x73625140]
    %v339 = vld.sshfl [vmem:[#allocation1 + $0x10] sm:$0xff pattern:$0x73625140]
    %v340 = vld.sshfl [vmem:[#allocation1 + $0x18] sm:$0xff pattern:$0x73625140]
    %v341 = vld.sshfl [vmem:[#allocation1 + $0x20] sm:$0xff pattern:$0x73625140]
    %v342 = vld.sshfl [vmem:[#allocation1 + $0x28] sm:$0xff pattern:$0x73625140]
    %v343 = vld.sshfl [vmem:[#allocation1 + $0x30] sm:$0xff pattern:$0x73625140]
    %v344 = vld.sshfl [vmem:[#allocation1 + $0x38] sm:$0xff pattern:$0x73625140]
    %v353 = vpack.c.bf16 %v337, %v337
    %v354 = vpack.c.bf16 %v338, %v338
    %v355 = vpack.c.bf16 %v339, %v339
    %v356 = vpack.c.bf16 %v340, %v340
    %v357 = vpack.c.bf16 %v341, %v341
    %v358 = vpack.c.bf16 %v342, %v342
    %v359 = vpack.c.bf16 %v343, %v343
    %v360 = vpack.c.bf16 %v344, %v344
    %v361 = vperm.slane %v38, 0
    %v490 = vunpack.c.l.b16 %v204
    %v491 = vunpack.c.l.b16 %v205
    %v492 = vunpack.c.l.b16 %v206
    %v493 = vunpack.c.l.b16 %v207
    %v494 = vunpack.c.l.b16 %v208
    %v495 = vunpack.c.l.b16 %v209
    %v496 = vunpack.c.l.b16 %v210
    %v497 = vunpack.c.l.b16 %v211
    %v498 = vunpack.c.l.b16 %v212
    %v499 = vunpack.c.l.b16 %v213
    %v500 = vunpack.c.l.b16 %v214
    %v501 = vunpack.c.l.b16 %v215
    %v502 = vunpack.c.l.b16 %v216
    %v503 = vunpack.c.l.b16 %v217
    %v504 = vunpack.c.l.b16 %v218
    %v505 = vunpack.c.l.b16 %v219
    %v506 = vunpack.c.l.b16 %v220
    %v507 = vunpack.c.l.b16 %v221
    %v508 = vunpack.c.l.b16 %v222
    %v509 = vunpack.c.l.b16 %v223
    %v510 = vunpack.c.l.b16 %v224
    %v511 = vunpack.c.l.b16 %v225
    %v512 = vunpack.c.l.b16 %v226
    %v513 = vunpack.c.l.b16 %v227
    %v514 = vunpack.c.l.b16 %v228
    %v515 = vunpack.c.l.b16 %v229
    %v516 = vunpack.c.l.b16 %v230
    %v517 = vunpack.c.l.b16 %v231
    %v518 = vunpack.c.l.b16 %v232
    %v519 = vunpack.c.l.b16 %v233
    %v520 = vunpack.c.l.b16 %v234
    %v521 = vunpack.c.l.b16 %v235
    %v522 = vunpack.c.l.b16 %v236
    %v523 = vunpack.c.l.b16 %v237
    %v524 = vunpack.c.l.b16 %v238
    %v525 = vunpack.c.l.b16 %v239
    %v526 = vunpack.c.l.b16 %v240
    %v527 = vunpack.c.l.b16 %v241
    %v528 = vunpack.c.l.b16 %v242
    %v529 = vunpack.c.l.b16 %v243
    %v530 = vunpack.c.l.b16 %v244
    %v531 = vunpack.c.l.b16 %v245
    %v532 = vunpack.c.l.b16 %v246
    %v533 = vunpack.c.l.b16 %v247
    %v534 = vunpack.c.l.b16 %v248
    %v535 = vunpack.c.l.b16 %v249
    %v536 = vunpack.c.l.b16 %v250
    %v537 = vunpack.c.l.b16 %v251
    %v538 = vunpack.c.l.b16 %v252
    %v539 = vunpack.c.l.b16 %v253
    %v540 = vunpack.c.l.b16 %v254
    %v541 = vunpack.c.l.b16 %v255
    %v542 = vunpack.c.l.b16 %v256
    %v543 = vunpack.c.l.b16 %v257
    %v544 = vunpack.c.l.b16 %v258
    %v545 = vunpack.c.l.b16 %v259
    %v546 = vunpack.c.l.b16 %v260
    %v547 = vunpack.c.l.b16 %v261
    %v548 = vunpack.c.l.b16 %v262
    %v549 = vunpack.c.l.b16 %v263
    %v550 = vunpack.c.l.b16 %v264
    %v551 = vunpack.c.l.b16 %v265
    %v552 = vunpack.c.l.b16 %v266
    %v553 = vunpack.c.l.b16 %v267
    %v554 = vunpack.c.l.b16 %v268
    %v555 = vunpack.c.l.b16 %v269
    %v556 = vunpack.c.l.b16 %v270
    %v557 = vunpack.c.l.b16 %v271
    %v558 = vunpack.c.l.b16 %v272
    %v559 = vunpack.c.l.b16 %v273
    %v560 = vunpack.c.l.b16 %v274
    %v561 = vunpack.c.l.b16 %v275
    %v562 = vunpack.c.l.b16 %v276
    %v563 = vunpack.c.l.b16 %v277
    %v564 = vunpack.c.l.b16 %v278
    %v565 = vunpack.c.l.b16 %v279
    %v566 = vunpack.c.l.b16 %v280
    %v567 = vunpack.c.l.b16 %v281
    %v568 = vunpack.c.l.b16 %v282
    %v569 = vunpack.c.l.b16 %v283
    %v570 = vunpack.c.l.b16 %v284
    %v571 = vunpack.c.l.b16 %v285
    %v572 = vunpack.c.l.b16 %v286
    %v573 = vunpack.c.l.b16 %v287
    %v574 = vunpack.c.l.b16 %v288
    %v575 = vunpack.c.l.b16 %v289
    %v576 = vunpack.c.l.b16 %v290
    %v577 = vunpack.c.l.b16 %v291
    %v578 = vunpack.c.l.b16 %v292
    %v579 = vunpack.c.l.b16 %v293
    %v580 = vunpack.c.l.b16 %v294
    %v581 = vunpack.c.l.b16 %v295
    %v582 = vunpack.c.l.b16 %v296
    %v583 = vunpack.c.l.b16 %v297
    %v584 = vunpack.c.l.b16 %v298
    %v585 = vunpack.c.l.b16 %v299
    %v586 = vunpack.c.l.b16 %v300
    %v587 = vunpack.c.l.b16 %v301
    %v588 = vunpack.c.l.b16 %v302
    %v589 = vunpack.c.l.b16 %v303
    %v590 = vunpack.c.l.b16 %v304
    %v591 = vunpack.c.l.b16 %v305
    %v592 = vunpack.c.l.b16 %v306
    %v593 = vunpack.c.l.b16 %v307
    %v594 = vunpack.c.l.b16 %v308
    %v595 = vunpack.c.l.b16 %v309
    %v596 = vunpack.c.l.b16 %v310
    %v597 = vunpack.c.l.b16 %v311
    %v598 = vunpack.c.l.b16 %v312
    %v599 = vunpack.c.l.b16 %v313
    %v600 = vunpack.c.l.b16 %v314
    %v601 = vunpack.c.l.b16 %v315
    %v602 = vunpack.c.l.b16 %v316
    %v603 = vunpack.c.l.b16 %v317
    %v604 = vunpack.c.l.b16 %v318
    %v605 = vunpack.c.l.b16 %v319
    %v606 = vunpack.c.l.b16 %v320
    %v607 = vunpack.c.l.b16 %v321
    %v608 = vunpack.c.l.b16 %v322
    %v609 = vunpack.c.l.b16 %v323
    %v610 = vunpack.c.l.b16 %v324
    %v611 = vunpack.c.l.b16 %v325
    %v612 = vunpack.c.l.b16 %v326
    %v613 = vunpack.c.l.b16 %v327
    %v614 = vunpack.c.l.b16 %v328
    %v615 = vunpack.c.l.b16 %v329
    %v616 = vunpack.c.l.b16 %v330
    %v617 = vunpack.c.l.b16 %v331
    %v618 = vpack.c.b16 %v491, %v490
    %v619 = vpack.c.b16 %v493, %v492
    %v620 = vpack.c.b16 %v495, %v494
    %v621 = vpack.c.b16 %v497, %v496
    %v622 = vpack.c.b16 %v499, %v498
    %v623 = vpack.c.b16 %v501, %v500
    %v624 = vpack.c.b16 %v503, %v502
    %v625 = vpack.c.b16 %v505, %v504
    %v626 = vpack.c.b16 %v507, %v506
    %v627 = vpack.c.b16 %v509, %v508
    %v628 = vpack.c.b16 %v511, %v510
    %v629 = vpack.c.b16 %v513, %v512
    %v630 = vpack.c.b16 %v515, %v514
    %v631 = vpack.c.b16 %v517, %v516
    %v632 = vpack.c.b16 %v519, %v518
    %v633 = vpack.c.b16 %v521, %v520
    %v634 = vpack.c.b16 %v523, %v522
    %v635 = vpack.c.b16 %v525, %v524
    %v636 = vpack.c.b16 %v527, %v526
    %v637 = vpack.c.b16 %v529, %v528
    %v638 = vpack.c.b16 %v531, %v530
    %v639 = vpack.c.b16 %v533, %v532
    %v640 = vpack.c.b16 %v535, %v534
    %v641 = vpack.c.b16 %v537, %v536
    %v642 = vpack.c.b16 %v539, %v538
    %v643 = vpack.c.b16 %v541, %v540
    %v644 = vpack.c.b16 %v543, %v542
    %v645 = vpack.c.b16 %v545, %v544
    %v646 = vpack.c.b16 %v547, %v546
    %v647 = vpack.c.b16 %v549, %v548
    %v648 = vpack.c.b16 %v551, %v550
    %v649 = vpack.c.b16 %v553, %v552
    %v650 = vpack.c.b16 %v555, %v554
    %v651 = vpack.c.b16 %v557, %v556
    %v652 = vpack.c.b16 %v559, %v558
    %v653 = vpack.c.b16 %v561, %v560
    %v654 = vpack.c.b16 %v563, %v562
    %v655 = vpack.c.b16 %v565, %v564
    %v656 = vpack.c.b16 %v567, %v566
    %v657 = vpack.c.b16 %v569, %v568
    %v658 = vpack.c.b16 %v571, %v570
    %v659 = vpack.c.b16 %v573, %v572
    %v660 = vpack.c.b16 %v575, %v574
    %v661 = vpack.c.b16 %v577, %v576
    %v662 = vpack.c.b16 %v579, %v578
    %v663 = vpack.c.b16 %v581, %v580
    %v664 = vpack.c.b16 %v583, %v582
    %v665 = vpack.c.b16 %v585, %v584
    %v666 = vpack.c.b16 %v587, %v586
    %v667 = vpack.c.b16 %v589, %v588
    %v668 = vpack.c.b16 %v591, %v590
    %v669 = vpack.c.b16 %v593, %v592
    %v670 = vpack.c.b16 %v595, %v594
    %v671 = vpack.c.b16 %v597, %v596
    %v672 = vpack.c.b16 %v599, %v598
    %v673 = vpack.c.b16 %v601, %v600
    %v674 = vpack.c.b16 %v603, %v602
    %v675 = vpack.c.b16 %v605, %v604
    %v676 = vpack.c.b16 %v607, %v606
    %v677 = vpack.c.b16 %v609, %v608
    %v678 = vpack.c.b16 %v611, %v610
    %v679 = vpack.c.b16 %v613, %v612
    %v680 = vpack.c.b16 %v615, %v614
    %v681 = vpack.c.b16 %v617, %v616
    %746 = vmatpush.bf16.msra.mxu0 %v625
    %747 = vmatpush.bf16.msra.mxu0 %v624
    %748 = vmatpush.bf16.msra.mxu0 %v623
    %749 = vmatpush.bf16.msra.mxu0 %v622
    %750 = vmatpush.bf16.msra.mxu0 %v621
    %751 = vmatpush.bf16.msra.mxu0 %v620
    %752 = vmatpush.bf16.msra.mxu0 %v619
    %753 = vmatpush.bf16.msra.mxu0 %v618
    %754 = vmatmul.bf16.gmra.mxu0 %v353
    %v755 = vpop.f32.mrf.mxu0
    %v756 = vadd.f32 %v361, %v755
    %v757 = vpop.f32.mrf.mxu0
    %758 = vdwg.mxu0
    %759 = vmatpush.bf16.msra.mxu0 %v633
    %760 = vmatpush.bf16.msra.mxu0 %v632
    %761 = vmatpush.bf16.msra.mxu0 %v631
    %762 = vmatpush.bf16.msra.mxu0 %v630
    %763 = vmatpush.bf16.msra.mxu0 %v629
    %764 = vmatpush.bf16.msra.mxu0 %v628
    %765 = vmatpush.bf16.msra.mxu0 %v627
    %766 = vmatpush.bf16.msra.mxu0 %v626
    %767 = vmatmul.bf16.gmra.mxu0 %v354
    %v768 = vpop.f32.mrf.mxu0
    %v769 = vadd.f32 %v756, %v768
    %v770 = vpop.f32.mrf.mxu0
    %771 = vdwg.mxu0
    %772 = vmatpush.bf16.msra.mxu0 %v641
    %773 = vmatpush.bf16.msra.mxu0 %v640
    %774 = vmatpush.bf16.msra.mxu0 %v639
    %775 = vmatpush.bf16.msra.mxu0 %v638
    %776 = vmatpush.bf16.msra.mxu0 %v637
    %777 = vmatpush.bf16.msra.mxu0 %v636
    %778 = vmatpush.bf16.msra.mxu0 %v635
    %779 = vmatpush.bf16.msra.mxu0 %v634
    %780 = vmatmul.bf16.gmra.mxu0 %v355
    %v781 = vpop.f32.mrf.mxu0
    %v782 = vadd.f32 %v769, %v781
    %v783 = vpop.f32.mrf.mxu0
    %784 = vdwg.mxu0
    %785 = vmatpush.bf16.msra.mxu0 %v649
    %786 = vmatpush.bf16.msra.mxu0 %v648
    %787 = vmatpush.bf16.msra.mxu0 %v647
    %788 = vmatpush.bf16.msra.mxu0 %v646
    %789 = vmatpush.bf16.msra.mxu0 %v645
    %790 = vmatpush.bf16.msra.mxu0 %v644
    %791 = vmatpush.bf16.msra.mxu0 %v643
    %792 = vmatpush.bf16.msra.mxu0 %v642
    %793 = vmatmul.bf16.gmra.mxu0 %v356
    %v794 = vpop.f32.mrf.mxu0
    %v795 = vadd.f32 %v782, %v794
    %v796 = vpop.f32.mrf.mxu0
    %797 = vdwg.mxu0
    %798 = vmatpush.bf16.msra.mxu0 %v657
    %799 = vmatpush.bf16.msra.mxu0 %v656
    %800 = vmatpush.bf16.msra.mxu0 %v655
    %801 = vmatpush.bf16.msra.mxu0 %v654
    %802 = vmatpush.bf16.msra.mxu0 %v653
    %803 = vmatpush.bf16.msra.mxu0 %v652
    %804 = vmatpush.bf16.msra.mxu0 %v651
    %805 = vmatpush.bf16.msra.mxu0 %v650
    %806 = vmatmul.bf16.gmra.mxu0 %v357
    %v807 = vpop.f32.mrf.mxu0
    %v808 = vadd.f32 %v795, %v807
    %v809 = vpop.f32.mrf.mxu0
    %810 = vdwg.mxu0
    %811 = vmatpush.bf16.msra.mxu0 %v665
    %812 = vmatpush.bf16.msra.mxu0 %v664
    %813 = vmatpush.bf16.msra.mxu0 %v663
    %814 = vmatpush.bf16.msra.mxu0 %v662
    %815 = vmatpush.bf16.msra.mxu0 %v661
    %816 = vmatpush.bf16.msra.mxu0 %v660
    %817 = vmatpush.bf16.msra.mxu0 %v659
    %818 = vmatpush.bf16.msra.mxu0 %v658
    %819 = vmatmul.bf16.gmra.mxu0 %v358
    %v820 = vpop.f32.mrf.mxu0
    %v821 = vadd.f32 %v808, %v820
    %v822 = vpop.f32.mrf.mxu0
    %823 = vdwg.mxu0
    %824 = vmatpush.bf16.msra.mxu0 %v673
    %825 = vmatpush.bf16.msra.mxu0 %v672
    %826 = vmatpush.bf16.msra.mxu0 %v671
    %827 = vmatpush.bf16.msra.mxu0 %v670
    %828 = vmatpush.bf16.msra.mxu0 %v669
    %829 = vmatpush.bf16.msra.mxu0 %v668
    %830 = vmatpush.bf16.msra.mxu0 %v667
    %831 = vmatpush.bf16.msra.mxu0 %v666
    %832 = vmatmul.bf16.gmra.mxu0 %v359
    %v833 = vpop.f32.mrf.mxu0
    %v834 = vadd.f32 %v821, %v833
    %v835 = vpop.f32.mrf.mxu0
    %836 = vdwg.mxu0
    %837 = vmatpush.bf16.msra.mxu0 %v681
    %838 = vmatpush.bf16.msra.mxu0 %v680
    %839 = vmatpush.bf16.msra.mxu0 %v679
    %840 = vmatpush.bf16.msra.mxu0 %v678
    %841 = vmatpush.bf16.msra.mxu0 %v677
    %842 = vmatpush.bf16.msra.mxu0 %v676
    %843 = vmatpush.bf16.msra.mxu0 %v675
    %844 = vmatpush.bf16.msra.mxu0 %v674
    %845 = vmatmul.bf16.gmra.mxu0 %v360
    %v846 = vpop.f32.mrf.mxu0
    %v847 = vadd.f32 %v834, %v846
    %v848 = vpop.f32.mrf.mxu0
    %849 = vdwg.mxu0
    %v850 = vmul.f32 %v847, 0.5
    %v851 = vmul.f32 %v847, 0.044715
    %v852 = vmul.f32 %v851, %v847
    %v853 = vmul.f32 %v852, %v847
    %v854 = vadd.f32 %v847, %v853
    %v855 = vmul.f32 %v854, 0.7978846
    %v856 = vtanh.pop %v855
    %v857 = vadd.f32 %v856, 1.0
    %v858 = vmul.f32 %v850, %v857
    %v859 = vpack.c.bf16 %v858, %v858
    %v860 = vperm.slane %v40, 0
    %v865 = vunpack.c.l.b16 %v32
    %v866 = vunpack.c.l.b16 %v33
    %v867 = vunpack.c.l.b16 %v34
    %v868 = vunpack.c.l.b16 %v35
    %v869 = vpack.c.b16 %v866, %v865
    %v870 = vpack.c.b16 %v868, %v867
    %v874 = vsel %vm60, %v859, 0
    %876 = vmatpush.bf16.msra.mxu0 0
    %877 = vmatpush.bf16.msra.mxu0 0
    %878 = vmatpush.bf16.msra.mxu0 0
    %879 = vmatpush.bf16.msra.mxu0 0
    %880 = vmatpush.bf16.msra.mxu0 0
    %881 = vmatpush.bf16.msra.mxu0 0
    %882 = vmatpush.bf16.msra.mxu0 %v870
    %883 = vmatpush.bf16.msra.mxu0 %v869
    %884 = vmatmul.bf16.gmra.mxu0 %v874
    %v885 = vpop.f32.mrf.mxu0
    %v886 = vadd.f32 %v860, %v885
    %v887 = vpop.f32.mrf.mxu0
    %888 = vdwg.mxu0
    %v889 = vmul.f32 %v886, 0.5
    %v890 = vmul.f32 %v886, 0.044715
    %v891 = vmul.f32 %v890, %v886
    %v892 = vmul.f32 %v891, %v886
    %v893 = vadd.f32 %v886, %v892
    %v894 = vmul.f32 %v893, 0.7978846
    %v895 = vtanh.pop %v894
    %v896 = vadd.f32 %v895, 1.0
    %v897 = vmul.f32 %v889, %v896
    %v898 = vpack.c.bf16 %v897, %v897
    %v900 = vunpack.c.l.b16 %v36
    %v901 = vpack.c.b16 %v900, %v900
    %902 = vrot.lane.b32.xlu0 %v901, 96
    %v903 = vpop.permute.xlu0 %902
    %v905 = vsel %vm140, %v898, 0
    %v908 = vsel %vm144, %v903, 0
    %910 = vmatpush.bf16.msra.mxu0 0
    %911 = vmatpush.bf16.msra.mxu0 0
    %912 = vmatpush.bf16.msra.mxu0 0
    %913 = vmatpush.bf16.msra.mxu0 0
    %914 = vmatpush.bf16.msra.mxu0 0
    %915 = vmatpush.bf16.msra.mxu0 0
    %916 = vmatpush.bf16.msra.mxu0 0
    %917 = vmatpush.bf16.msra.mxu0 %v908
    %918 = vmatmul.bf16.gmra.mxu0 %v905
    %v919 = vpop.f32.mrf.mxu0
    %v920 = vadd.f32 0.0, %v919
    %v921 = vpop.f32.mrf.mxu0
    %922 = vdwg.mxu0
    %v923 = vadd.f32 %v858, %v920
    %v924 = vperm.slane %v43, 0
    %v925 = vadd.f32 %v923, %v924
    %v926 = vpack.c.bf16 %v200, %v200
    %v927 = vpack.c.bf16 %v925, %v925
    %v928 = vunpack.c.h.b16 %v32
    %v929 = vunpack.c.h.b16 %v33
    %v930 = vunpack.c.h.b16 %v34
    %v931 = vunpack.c.h.b16 %v35
    %v932 = vpack.c.b16 %v929, %v928
    %v933 = vpack.c.b16 %v931, %v930
    %934 = vrot.lane.b32.xlu0 %v869, 120
    %v935 = vpop.permute.xlu0 %934
    %936 = vrot.lane.b32.xlu0 %v932, 120
    %v937 = vpop.permute.xlu0 %936
    %938 = vrot.lane.b32.xlu0 %v870, 120
    %v939 = vpop.permute.xlu0 %938
    %940 = vrot.lane.b32.xlu0 %v933, 120
    %v941 = vpop.permute.xlu0 %940
    %vm942 = vcmask 982016
    %v943 = vsel %vm942, %v935, %v937
    %v944 = vsel %vm942, %v939, %v941
    %v948 = vsel %vm60, %v927, 0
    %950 = vmatpush.bf16.msra.mxu0 0
    %951 = vmatpush.bf16.msra.mxu0 0
    %952 = vmatpush.bf16.msra.mxu0 0
    %953 = vmatpush.bf16.msra.mxu0 0
    %954 = vmatpush.bf16.msra.mxu0 0
    %955 = vmatpush.bf16.msra.mxu0 0
    %956 = vmatpush.bf16.msra.mxu0 %v944
    %957 = vmatpush.bf16.msra.mxu0 %v943
    %958 = vmatmul.bf16.gmra.mxu0 %v948
    %v959 = vpop.f32.mrf.mxu0
    %v960 = vadd.f32 0.0, %v959
    %v961 = vpop.f32.mrf.mxu0
    %962 = vdwg.mxu0
    %v963 = vunpack.c.h.b16 %v28
    %v964 = vunpack.c.h.b16 %v29
    %v965 = vunpack.c.h.b16 %v30
    %v966 = vunpack.c.h.b16 %v31
    %v967 = vpack.c.b16 %v964, %v963
    %v968 = vpack.c.b16 %v966, %v965
    %969 = vrot.lane.b32.xlu0 %v56, 88
    %v970 = vpop.permute.xlu0 %969
    %971 = vrot.lane.b32.xlu0 %v967, 88
    %v972 = vpop.permute.xlu0 %971
    %973 = vrot.lane.b32.xlu0 %v57, 88
    %v974 = vpop.permute.xlu0 %973
    %975 = vrot.lane.b32.xlu0 %v968, 88
    %v976 = vpop.permute.xlu0 %975
    %vm977 = vcmask 719872
    %v978 = vsel %vm977, %v970, %v972
    %v979 = vsel %vm977, %v974, %v976
    %v983 = vsel %vm60, %v926, 0
    %985 = vmatpush.bf16.msra.mxu0 0
    %986 = vmatpush.bf16.msra.mxu0 0
    %987 = vmatpush.bf16.msra.mxu0 0
    %988 = vmatpush.bf16.msra.mxu0 0
    %989 = vmatpush.bf16.msra.mxu0 0
    %990 = vmatpush.bf16.msra.mxu0 0
    %991 = vmatpush.bf16.msra.mxu0 %v979
    %992 = vmatpush.bf16.msra.mxu0 %v978
    %993 = vmatmul.bf16.gmra.mxu0 %v983
    %v994 = vpop.f32.mrf.mxu0
    %v995 = vadd.f32 %v960, %v994
    %v996 = vpop.f32.mrf.mxu0
    %997 = vdwg.mxu0
    %v998 = vperm.slane %v41, 0
    %v999 = vadd.f32 %v995, %v998
    %1000 = vst [vmem:[#allocation2] sm:$0x3] %v999
    // Predicated region
    $region30: #{tpu_custom_call.1} parent=1 // pred_check
      _
    $region31: #{tpu_custom_call.1} parent=1 // pred_check_branch
      %1002 = sbr.rel (0) target = $region33
    $region32: #{tpu_custom_call.1} parent=1 // pred_region
      %1004 = vsyncadd [#allocation3], 0
      %s1006 = sshll.u32 [#allocation2], 4
      %s1007 = int_to_ptr.vmem [resolvable:$true] %s1006
      %s1008 = sshll.u32 %s7, 4
      %s1009 = int_to_ptr.hbm [resolvable:$true] %s1008
      %1011 = dma.vmem_to_hbm [thread:$0]  %s1007, 32, %s1009, [#allocation3]
    $region33: #{tpu_custom_call.1} parent=1 // pred_fallthru
      _
    // Predicated region
    $region34: #{tpu_custom_call.1} parent=1 // pred_check
      _
    $region35: #{tpu_custom_call.1} parent=1 // pred_check_branch
      %1013 = sbr.rel (0) target = $region37
    $region36: #{tpu_custom_call.1} parent=1 // pred_region
      %1015 = dma.done [#allocation3], 32
    $region37: #{tpu_custom_call.1} parent=1 // pred_fallthru
      _
    %1016 = vsyncpa [#allocation3], 1

</llo_original>
